<compile_context>
chip_gen: v6e
topology: v6e:2x2x1
jax: 0.10.0
libtpu: 0.0.40
codegen_flags: <defaults>
</compile_context>

<pallas_src>
import jax
import jax.numpy as jnp
from jax.experimental import pallas as pl
from jax.experimental.pallas import tpu as pltpu


_MXU_MIN_BATCH = 8      # below this the (B, 2Cin) LHS leaves the MXU ~empty
_MXU_MIN_CHANNELS = 64  # so the contraction dim is at least 64 (>=128 realified)


def _cdiv(a, b):
    return (a + b - 1) // b


def _vmem_params():
    """(per-step tile budget, vmem_limit_bytes), generation-aware.

    v5e/v6e have 128 MiB physical VMEM -> large tiles; v7x has only 64 MiB ->
    stay conservative.  Falls back to the conservative setting if the query
    fails."""
    budget, limit = 14 * 1024 * 1024, 48 * 1024 * 1024
    try:
        info = pltpu.get_tpu_info()
        if getattr(info, "vmem_capacity_bytes", 0) >= 96 * 1024 * 1024:
            budget, limit = 32 * 1024 * 1024, 96 * 1024 * 1024
    except Exception:
        pass
    return budget, limit


# ----------------------------------------------------------------------------
# VPU path: modes on lanes, [Re | Im] folded onto the channel / sublane axis.
# ----------------------------------------------------------------------------
def _vpu_cmul_kernel(x_ref, w_ref, o_ref):
    # x_ref: (B,   2*Cin,  Mt) f32, rows [0:Cin]  = Re(x), [Cin:]  = Im(x)
    # w_ref: (Cin, 2*Cout, Mt) f32, rows [0:Cout] = Re(w), [Cout:] = Im(w)
    # o_ref: (B,   2*Cout, Mt) f32, rows [0:Cout] = Re(o), [Cout:] = Im(o)
    b, two_cin, mt = x_ref.shape
    cin = two_cin // 2
    cout = w_ref.shape[1] // 2

    x = x_ref[...]
    w = w_ref[...]
    acc_r = jnp.zeros((b, cout, mt), jnp.float32)
    acc_i = jnp.zeros((b, cout, mt), jnp.float32)
    # Unrolled accumulation over input channels: live set stays at
    # ~2 x (B, Cout, Mt) instead of materializing (B, Cin, Cout, Mt) products.
    for i in range(cin):
        xr = x[:, i, :][:, None, :]          # (B, 1, Mt)
        xi = x[:, cin + i, :][:, None, :]    # (B, 1, Mt)
        wr = w[i, :cout, :][None]            # (1, Cout, Mt)
        wi = w[i, cout:, :][None]            # (1, Cout, Mt)
        acc_r = acc_r + (xr * wr - xi * wi)
        acc_i = acc_i + (xr * wi + xi * wr)
    o_ref[:, :cout, :] = acc_r
    o_ref[:, cout:, :] = acc_i


def _mode_mix_vpu(x_ri, w_ri, n_modes):
    """x_ri: f32 (B, 2*Cin, M); w_ri: f32 (Cin, 2*Cout, M).
    Returns f32 (B, 2*Cout, M)."""
    B, two_cin, _ = x_ri.shape
    cin = two_cin // 2
    two_cout = w_ri.shape[1]
    cout = two_cout // 2

    budget, vmem_limit = _vmem_params()

    # Honest per-lane footprint: double-buffered I/O + live accumulators.
    per_lane = 4 * (2 * (B * two_cin + cin * two_cout + B * two_cout)
                    + 2 * B * cout + 2 * (B + cout))
    per_unit = per_lane * 128                     # one 128-lane mode unit

    n128 = _cdiv(n_modes, 128)                    # lane units after padding
    max_units = max(1, budget // per_unit)
    if n128 >= 2:
        # keep >= 2 grid steps so both v7x TensorCores get work
        max_units = min(max_units, max(1, n128 // 2))
    max_units = min(max_units, n128)
    # largest divisor of n128 -> no mostly-empty tail tiles beyond 128 granule
    units = max(d for d in range(1, max_units + 1) if n128 % d == 0)
    mt = units * 128
    mp = n128 * 128

    pad = mp - n_modes
    if pad:
        x_ri = jnp.pad(x_ri, ((0, 0), (0, 0), (0, pad)))
        w_ri = jnp.pad(w_ri, ((0, 0), (0, 0), (0, pad)))

    flops = 8 * n_modes * B * cin * cout
    bytes_accessed = 4 * n_modes * (B * two_cin + cin * two_cout + B * two_cout)

    out = pl.pallas_call(
        _vpu_cmul_kernel,
        out_shape=jax.ShapeDtypeStruct((B, two_cout, mp), jnp.float32),
        grid_spec=pltpu.PrefetchScalarGridSpec(
            num_scalar_prefetch=0,
            grid=(mp // mt,),
            in_specs=[
                pl.BlockSpec((B, two_cin, mt), lambda m: (0, 0, m)),
                pl.BlockSpec((cin, two_cout, mt), lambda m: (0, 0, m)),
            ],
            out_specs=pl.BlockSpec((B, two_cout, mt), lambda m: (0, 0, m)),
        ),
        compiler_params=pltpu.CompilerParams(
            dimension_semantics=("parallel",),
            vmem_limit_bytes=vmem_limit,
        ),
        cost_estimate=pl.CostEstimate(
            flops=flops, transcendentals=0, bytes_accessed=bytes_accessed),
    )(x_ri, w_ri)
    return out[..., :n_modes]


# ----------------------------------------------------------------------------
# MXU path (large B and channels): bf16 batched matmuls, f32 accumulation.
# ----------------------------------------------------------------------------
def _mxu_cmul_kernel(xr_ref, xi_ref, wr_ref, wi_ref, o_ref):
    # xr/xi: (Mb, B, Cin) bf16; wr/wi: (Mb, Cin, Cout) bf16
    # o_ref: (Mb, B, 2*Cout) f32 -- [Re | Im] on the lane axis
    xr = xr_ref[...]
    xi = xi_ref[...]
    wr = wr_ref[...]
    wi = wi_ref[...]

    def bmm(a, b):  # (Mb,B,Cin) x (Mb,Cin,Cout) -> (Mb,B,Cout), f32 accumulate
        return jnp.einsum('mbi,mio->mbo', a, b,
                          preferred_element_type=jnp.float32)

    o_real = bmm(xr, wr) - bmm(xi, wi)
    o_imag = bmm(xr, wi) + bmm(xi, wr)
    # single lane-dense store (last dim 2*Cout >= 128 on this path)
    o_ref[...] = jnp.concatenate([o_real, o_imag], axis=-1)


def _mode_mix_mxu(xr, xi, wr, wi, n_modes):
    """xr/xi: bf16 (M, B, Cin); wr/wi: bf16 (M, Cin, Cout).
    Returns f32 (M, B, 2*Cout)."""
    _, B, cin = xr.shape
    cout = wr.shape[-1]

    budget, vmem_limit = _vmem_params()

    per_mode = (2 * 2 * (2 * B * cin)        # xr+xi, bf16, double-buffered
                + 2 * 2 * (2 * cin * cout)   # wr+wi, bf16, double-buffered
                + 2 * 4 * (2 * B * cout)     # output, f32, double-buffered
                + 4 * 6 * B * cout)          # matmul temporaries (f32)
    mb = max(8, budget // per_mode)
    if n_modes >= 16:
        mb = min(mb, _cdiv(n_modes, 2))      # >= 2 grid steps for v7x's 2nd TC
    mb = min(mb, n_modes)
    mp = _cdiv(n_modes, mb) * mb

    pad = mp - n_modes
    if pad:
        pad3 = ((0, pad), (0, 0), (0, 0))
        xr, xi, wr, wi = (jnp.pad(a, pad3) for a in (xr, xi, wr, wi))

    flops = 8 * n_modes * B * cin * cout
    bytes_accessed = (2 * 2 * n_modes * (B * cin + cin * cout)   # bf16 inputs
                      + 4 * n_modes * 2 * B * cout)              # f32 output

    out = pl.pallas_call(
        _mxu_cmul_kernel,
        out_shape=jax.ShapeDtypeStruct((mp, B, 2 * cout), jnp.float32),
        grid_spec=pltpu.PrefetchScalarGridSpec(
            num_scalar_prefetch=0,
            grid=(mp // mb,),
            in_specs=[
                pl.BlockSpec((mb, B, cin), lambda m: (m, 0, 0)),
                pl.BlockSpec((mb, B, cin), lambda m: (m, 0, 0)),
                pl.BlockSpec((mb, cin, cout), lambda m: (m, 0, 0)),
                pl.BlockSpec((mb, cin, cout), lambda m: (m, 0, 0)),
            ],
            out_specs=pl.BlockSpec((mb, B, 2 * cout), lambda m: (m, 0, 0)),
        ),
        compiler_params=pltpu.CompilerParams(
            dimension_semantics=("parallel",),
            vmem_limit_bytes=vmem_limit,
        ),
        cost_estimate=pl.CostEstimate(
            flops=flops, transcendentals=0, bytes_accessed=bytes_accessed),
    )(xr, xi, wr, wi)
    return out[:n_modes]


# ----------------------------------------------------------------------------
# Module forward
# ----------------------------------------------------------------------------
def spectral_conv2d(x, weights1, weights2, modes1, modes2):
    """x: (B, C_in, H, W) float32.  weights1/weights2: (C_in, C_out, m1, m2)
    complex64.  Returns (B, C_out, H, W) float32 -- same semantics as the
    PyTorch SpectralConv2d.forward."""
    B, Cin, H, W = x.shape
    Cout = weights1.shape[1]
    Wf = W // 2 + 1
    m1, m2 = modes1, modes2
    M = 2 * m1 * m2

    x_ft = jnp.fft.rfft2(x)  # (B, Cin, H, Wf) complex64

    # Gather both retained corner blocks into one slab and flatten the modes.
    corners = jnp.concatenate(
        [x_ft[:, :, :m1, :m2], x_ft[:, :, -m1:, :m2]], axis=2)
    w_all = jnp.concatenate([weights1, weights2], axis=2).astype(jnp.complex64)

    x_modes = corners.reshape(B, Cin, M)    # (B, Cin, M) complex
    w_modes = w_all.reshape(Cin, Cout, M)   # (Cin, Cout, M) complex

    use_mxu = (B >= _MXU_MIN_BATCH) and (min(Cin, Cout) >= _MXU_MIN_CHANNELS)

    if use_mxu:
        # bf16 operands (MXU-native on v6e/v7x, halves HBM traffic), f32 acc.
        # wr / wi are each streamed once; no duplicated 2x2 block in HBM.
        xm = jnp.transpose(x_modes, (2, 0, 1))   # (M, B, Cin)
        wm = jnp.transpose(w_modes, (2, 0, 1))   # (M, Cin, Cout)
        xr = jnp.real(xm).astype(jnp.bfloat16)
        xi = jnp.imag(xm).astype(jnp.bfloat16)
        wr = jnp.real(wm).astype(jnp.bfloat16)
        wi = jnp.imag(wm).astype(jnp.bfloat16)
        out = _mode_mix_mxu(xr, xi, wr, wi, M)              # (M, B, 2*Cout) f32
        out_c = (out[..., :Cout] + 1j * out[..., Cout:]).astype(jnp.complex64)
        out_corners = jnp.transpose(out_c, (1, 2, 0)).reshape(B, Cout, 2 * m1, m2)
    else:
        # VPU path: [Re | Im] folded onto the channel (sublane) axis, f32.
        x_ri = jnp.concatenate(
            [jnp.real(x_modes), jnp.imag(x_modes)], axis=1).astype(jnp.float32)
        w_ri = jnp.concatenate(
            [jnp.real(w_modes), jnp.imag(w_modes)], axis=1).astype(jnp.float32)
        out = _mode_mix_vpu(x_ri, w_ri, M)                   # (B, 2*Cout, M)
        out_c = (out[:, :Cout, :] + 1j * out[:, Cout:, :]).astype(jnp.complex64)
        out_corners = out_c.reshape(B, Cout, 2 * m1, m2)

    # Scatter corners back (same order / overwrite semantics as PyTorch).
    out_ft = jnp.zeros((B, Cout, H, Wf), dtype=jnp.complex64)
    out_ft = out_ft.at[:, :, :m1, :m2].set(out_corners[:, :, :m1])
    out_ft = out_ft.at[:, :, -m1:, :m2].set(out_corners[:, :, m1:])

    return jnp.fft.irfft2(out_ft, s=(H, W))


def _reference(x, weights1, weights2, modes1, modes2):
    """Pure-JAX reference (mirrors the PyTorch forward exactly, f32)."""
    B, Cin, H, W = x.shape
    Cout = weights1.shape[1]
    x_ft = jnp.fft.rfft2(x)
    out_ft = jnp.zeros((B, Cout, H, W // 2 + 1), dtype=jnp.complex64)
    out_ft = out_ft.at[:, :, :modes1, :modes2].set(
        jnp.einsum('bixy,ioxy->boxy', x_ft[:, :, :modes1, :modes2], weights1))
    out_ft = out_ft.at[:, :, -modes1:, :modes2].set(
        jnp.einsum('bixy,ioxy->boxy', x_ft[:, :, -modes1:, :modes2], weights2))
    return jnp.fft.irfft2(out_ft, s=(H, W))


def _make_weights(key, Cin, Cout, m1, m2):
    kr, ki = jax.random.split(key)
    scale = 1.0 / (Cin * Cout)
    # torch.rand(..., dtype=cfloat) draws real/imag uniformly in [0, 1).
    return scale * (
        jax.random.uniform(kr, (Cin, Cout, m1, m2), dtype=jnp.float32)
        + 1j * jax.random.uniform(ki, (Cin, Cout, m1, m2), dtype=jnp.float32)
    ).astype(jnp.complex64)


if __name__ == "__main__":
    key = jax.random.PRNGKey(0)
    ks = jax.random.split(key, 9)
    modes1, modes2 = 4, 4
    H, W = 16, 16

    # --- Config 1: tiny channels -> VPU path (f32, tight tolerance) ---------
    B, Cin, Cout = 2, 4, 4
    x = jax.random.normal(ks[0], (B, Cin, H, W), dtype=jnp.float32)
    w1 = _make_weights(ks[1], Cin, Cout, modes1, modes2)
    w2 = _make_weights(ks[2], Cin, Cout, modes1, modes2)
    out = jax.block_until_ready(spectral_conv2d(x, w1, w2, modes1, modes2))
    ref = jax.block_until_ready(_reference(x, w1, w2, modes1, modes2))
    assert out.shape == (B, Cout, H, W)
    assert jnp.allclose(out, ref, atol=1e-5, rtol=1e-5)

    # --- Config 2: wider channels, small batch -> still VPU path (f32) ------
    B2, Cin2, Cout2 = 2, 40, 40
    x2 = jax.random.normal(ks[3], (B2, Cin2, H, W), dtype=jnp.float32)
    w3 = _make_weights(ks[4], Cin2, Cout2, modes1, modes2)
    w4 = _make_weights(ks[5], Cin2, Cout2, modes1, modes2)
    out2 = jax.block_until_ready(spectral_conv2d(x2, w3, w4, modes1, modes2))
    ref2 = jax.block_until_ready(_reference(x2, w3, w4, modes1, modes2))
    assert out2.shape == (B2, Cout2, H, W)
    assert jnp.allclose(out2, ref2, atol=1e-5, rtol=1e-5)

    # --- Config 3: big batch & channels -> bf16 MXU path (looser tolerance) -
    B3, Cin3, Cout3 = 8, 64, 64
    x3 = jax.random.normal(ks[6], (B3, Cin3, H, W), dtype=jnp.float32)
    w5 = _make_weights(ks[7], Cin3, Cout3, modes1, modes2)
    w6 = _make_weights(ks[8], Cin3, Cout3, modes1, modes2)
    out3 = jax.block_until_ready(spectral_conv2d(x3, w5, w6, modes1, modes2))
    ref3 = jax.block_until_ready(_reference(x3, w5, w6, modes1, modes2))
    assert out3.shape == (B3, Cout3, H, W)
    rel_err = float(jnp.max(jnp.abs(out3 - ref3)) /
                    (jnp.max(jnp.abs(ref3)) + 1e-12))
    assert rel_err < 2e-2, f"bf16 MXU path rel err too high: {rel_err}"

    print("KERNEL_OK")
</pallas_src>

<mosaic_0001>
module attributes {stable_mosaic.version = 11 : i64} {
  func.func @_vpu_cmul_kernel(%arg0: i32, %arg1: memref<2x8x128xf32, #tpu.memory_space<vmem>>, %arg2: memref<4x8x128xf32, #tpu.memory_space<vmem>>, %arg3: memref<2x8x128xf32, #tpu.memory_space<vmem>>) attributes {dimension_semantics = [#tpu.dimension_semantics<parallel>], iteration_bounds = array<i64: 1>, scalar_prefetch = 0 : i64, scratch_operands = 0 : i64, tpu.core_type = #tpu.core_type<tc>, window_params = [{transform_indices = @transform_0, window_bounds = array<i64: 2, 8, 128>}, {transform_indices = @transform_1, window_bounds = array<i64: 4, 8, 128>}, {transform_indices = @transform_2, window_bounds = array<i64: 2, 8, 128>}]} {
    %c0 = arith.constant 0 : index
    %c0_0 = arith.constant 0 : index
    %c0_1 = arith.constant 0 : index
    %0 = vector.load %arg1[%c0, %c0_0, %c0_1] : memref<2x8x128xf32, #tpu.memory_space<vmem>>, vector<2x8x128xf32>
    %c0_2 = arith.constant 0 : index
    %c0_3 = arith.constant 0 : index
    %c0_4 = arith.constant 0 : index
    %1 = vector.load %arg2[%c0_2, %c0_3, %c0_4] : memref<4x8x128xf32, #tpu.memory_space<vmem>>, vector<4x8x128xf32>
    %cst = arith.constant 0.000000e+00 : f32
    %2 = vector.broadcast %cst : f32 to vector<2x4x128xf32>
    %cst_5 = arith.constant 0.000000e+00 : f32
    %3 = vector.broadcast %cst_5 : f32 to vector<2x4x128xf32>
    %4 = vector.extract_strided_slice %0 {offsets = [0, 0, 0], sizes = [2, 1, 128], strides = [1, 1, 1]} : vector<2x8x128xf32> to vector<2x1x128xf32>
    %5 = vector.shape_cast %4 : vector<2x1x128xf32> to vector<2x128xf32>
    %6 = vector.shape_cast %5 : vector<2x128xf32> to vector<2x1x128xf32>
    %7 = vector.extract_strided_slice %0 {offsets = [0, 4, 0], sizes = [2, 1, 128], strides = [1, 1, 1]} : vector<2x8x128xf32> to vector<2x1x128xf32>
    %8 = vector.shape_cast %7 : vector<2x1x128xf32> to vector<2x128xf32>
    %9 = vector.shape_cast %8 : vector<2x128xf32> to vector<2x1x128xf32>
    %10 = vector.extract_strided_slice %1 {offsets = [0, 0, 0], sizes = [1, 4, 128], strides = [1, 1, 1]} : vector<4x8x128xf32> to vector<1x4x128xf32>
    %11 = vector.shape_cast %10 : vector<1x4x128xf32> to vector<4x128xf32>
    %12 = vector.shape_cast %11 : vector<4x128xf32> to vector<1x4x128xf32>
    %13 = vector.extract_strided_slice %1 {offsets = [0, 4, 0], sizes = [1, 4, 128], strides = [1, 1, 1]} : vector<4x8x128xf32> to vector<1x4x128xf32>
    %14 = vector.shape_cast %13 : vector<1x4x128xf32> to vector<4x128xf32>
    %15 = vector.shape_cast %14 : vector<4x128xf32> to vector<1x4x128xf32>
    %16 = vector.broadcast %6 : vector<2x1x128xf32> to vector<2x4x128xf32>
    %17 = vector.broadcast %12 : vector<1x4x128xf32> to vector<2x4x128xf32>
    %18 = arith.mulf %16, %17 : vector<2x4x128xf32>
    %19 = vector.broadcast %9 : vector<2x1x128xf32> to vector<2x4x128xf32>
    %20 = vector.broadcast %15 : vector<1x4x128xf32> to vector<2x4x128xf32>
    %21 = arith.mulf %19, %20 : vector<2x4x128xf32>
    %22 = arith.subf %18, %21 : vector<2x4x128xf32>
    %23 = arith.addf %2, %22 : vector<2x4x128xf32>
    %24 = vector.broadcast %6 : vector<2x1x128xf32> to vector<2x4x128xf32>
    %25 = vector.broadcast %15 : vector<1x4x128xf32> to vector<2x4x128xf32>
    %26 = arith.mulf %24, %25 : vector<2x4x128xf32>
    %27 = vector.broadcast %9 : vector<2x1x128xf32> to vector<2x4x128xf32>
    %28 = vector.broadcast %12 : vector<1x4x128xf32> to vector<2x4x128xf32>
    %29 = arith.mulf %27, %28 : vector<2x4x128xf32>
    %30 = arith.addf %26, %29 : vector<2x4x128xf32>
    %31 = arith.addf %3, %30 : vector<2x4x128xf32>
    %32 = vector.extract_strided_slice %0 {offsets = [0, 1, 0], sizes = [2, 1, 128], strides = [1, 1, 1]} : vector<2x8x128xf32> to vector<2x1x128xf32>
    %33 = vector.shape_cast %32 : vector<2x1x128xf32> to vector<2x128xf32>
    %34 = vector.shape_cast %33 : vector<2x128xf32> to vector<2x1x128xf32>
    %35 = vector.extract_strided_slice %0 {offsets = [0, 5, 0], sizes = [2, 1, 128], strides = [1, 1, 1]} : vector<2x8x128xf32> to vector<2x1x128xf32>
    %36 = vector.shape_cast %35 : vector<2x1x128xf32> to vector<2x128xf32>
    %37 = vector.shape_cast %36 : vector<2x128xf32> to vector<2x1x128xf32>
    %38 = vector.extract_strided_slice %1 {offsets = [1, 0, 0], sizes = [1, 4, 128], strides = [1, 1, 1]} : vector<4x8x128xf32> to vector<1x4x128xf32>
    %39 = vector.shape_cast %38 : vector<1x4x128xf32> to vector<4x128xf32>
    %40 = vector.shape_cast %39 : vector<4x128xf32> to vector<1x4x128xf32>
    %41 = vector.extract_strided_slice %1 {offsets = [1, 4, 0], sizes = [1, 4, 128], strides = [1, 1, 1]} : vector<4x8x128xf32> to vector<1x4x128xf32>
    %42 = vector.shape_cast %41 : vector<1x4x128xf32> to vector<4x128xf32>
    %43 = vector.shape_cast %42 : vector<4x128xf32> to vector<1x4x128xf32>
    %44 = vector.broadcast %34 : vector<2x1x128xf32> to vector<2x4x128xf32>
    %45 = vector.broadcast %40 : vector<1x4x128xf32> to vector<2x4x128xf32>
    %46 = arith.mulf %44, %45 : vector<2x4x128xf32>
    %47 = vector.broadcast %37 : vector<2x1x128xf32> to vector<2x4x128xf32>
    %48 = vector.broadcast %43 : vector<1x4x128xf32> to vector<2x4x128xf32>
    %49 = arith.mulf %47, %48 : vector<2x4x128xf32>
    %50 = arith.subf %46, %49 : vector<2x4x128xf32>
    %51 = arith.addf %23, %50 : vector<2x4x128xf32>
    %52 = vector.broadcast %34 : vector<2x1x128xf32> to vector<2x4x128xf32>
    %53 = vector.broadcast %43 : vector<1x4x128xf32> to vector<2x4x128xf32>
    %54 = arith.mulf %52, %53 : vector<2x4x128xf32>
    %55 = vector.broadcast %37 : vector<2x1x128xf32> to vector<2x4x128xf32>
    %56 = vector.broadcast %40 : vector<1x4x128xf32> to vector<2x4x128xf32>
    %57 = arith.mulf %55, %56 : vector<2x4x128xf32>
    %58 = arith.addf %54, %57 : vector<2x4x128xf32>
    %59 = arith.addf %31, %58 : vector<2x4x128xf32>
    %60 = vector.extract_strided_slice %0 {offsets = [0, 2, 0], sizes = [2, 1, 128], strides = [1, 1, 1]} : vector<2x8x128xf32> to vector<2x1x128xf32>
    %61 = vector.shape_cast %60 : vector<2x1x128xf32> to vector<2x128xf32>
    %62 = vector.shape_cast %61 : vector<2x128xf32> to vector<2x1x128xf32>
    %63 = vector.extract_strided_slice %0 {offsets = [0, 6, 0], sizes = [2, 1, 128], strides = [1, 1, 1]} : vector<2x8x128xf32> to vector<2x1x128xf32>
    %64 = vector.shape_cast %63 : vector<2x1x128xf32> to vector<2x128xf32>
    %65 = vector.shape_cast %64 : vector<2x128xf32> to vector<2x1x128xf32>
    %66 = vector.extract_strided_slice %1 {offsets = [2, 0, 0], sizes = [1, 4, 128], strides = [1, 1, 1]} : vector<4x8x128xf32> to vector<1x4x128xf32>
    %67 = vector.shape_cast %66 : vector<1x4x128xf32> to vector<4x128xf32>
    %68 = vector.shape_cast %67 : vector<4x128xf32> to vector<1x4x128xf32>
    %69 = vector.extract_strided_slice %1 {offsets = [2, 4, 0], sizes = [1, 4, 128], strides = [1, 1, 1]} : vector<4x8x128xf32> to vector<1x4x128xf32>
    %70 = vector.shape_cast %69 : vector<1x4x128xf32> to vector<4x128xf32>
    %71 = vector.shape_cast %70 : vector<4x128xf32> to vector<1x4x128xf32>
    %72 = vector.broadcast %62 : vector<2x1x128xf32> to vector<2x4x128xf32>
    %73 = vector.broadcast %68 : vector<1x4x128xf32> to vector<2x4x128xf32>
    %74 = arith.mulf %72, %73 : vector<2x4x128xf32>
    %75 = vector.broadcast %65 : vector<2x1x128xf32> to vector<2x4x128xf32>
    %76 = vector.broadcast %71 : vector<1x4x128xf32> to vector<2x4x128xf32>
    %77 = arith.mulf %75, %76 : vector<2x4x128xf32>
    %78 = arith.subf %74, %77 : vector<2x4x128xf32>
    %79 = arith.addf %51, %78 : vector<2x4x128xf32>
    %80 = vector.broadcast %62 : vector<2x1x128xf32> to vector<2x4x128xf32>
    %81 = vector.broadcast %71 : vector<1x4x128xf32> to vector<2x4x128xf32>
    %82 = arith.mulf %80, %81 : vector<2x4x128xf32>
    %83 = vector.broadcast %65 : vector<2x1x128xf32> to vector<2x4x128xf32>
    %84 = vector.broadcast %68 : vector<1x4x128xf32> to vector<2x4x128xf32>
    %85 = arith.mulf %83, %84 : vector<2x4x128xf32>
    %86 = arith.addf %82, %85 : vector<2x4x128xf32>
    %87 = arith.addf %59, %86 : vector<2x4x128xf32>
    %88 = vector.extract_strided_slice %0 {offsets = [0, 3, 0], sizes = [2, 1, 128], strides = [1, 1, 1]} : vector<2x8x128xf32> to vector<2x1x128xf32>
    %89 = vector.shape_cast %88 : vector<2x1x128xf32> to vector<2x128xf32>
    %90 = vector.shape_cast %89 : vector<2x128xf32> to vector<2x1x128xf32>
    %91 = vector.extract_strided_slice %0 {offsets = [0, 7, 0], sizes = [2, 1, 128], strides = [1, 1, 1]} : vector<2x8x128xf32> to vector<2x1x128xf32>
    %92 = vector.shape_cast %91 : vector<2x1x128xf32> to vector<2x128xf32>
    %93 = vector.shape_cast %92 : vector<2x128xf32> to vector<2x1x128xf32>
    %94 = vector.extract_strided_slice %1 {offsets = [3, 0, 0], sizes = [1, 4, 128], strides = [1, 1, 1]} : vector<4x8x128xf32> to vector<1x4x128xf32>
    %95 = vector.shape_cast %94 : vector<1x4x128xf32> to vector<4x128xf32>
    %96 = vector.shape_cast %95 : vector<4x128xf32> to vector<1x4x128xf32>
    %97 = vector.extract_strided_slice %1 {offsets = [3, 4, 0], sizes = [1, 4, 128], strides = [1, 1, 1]} : vector<4x8x128xf32> to vector<1x4x128xf32>
    %98 = vector.shape_cast %97 : vector<1x4x128xf32> to vector<4x128xf32>
    %99 = vector.shape_cast %98 : vector<4x128xf32> to vector<1x4x128xf32>
    %100 = vector.broadcast %90 : vector<2x1x128xf32> to vector<2x4x128xf32>
    %101 = vector.broadcast %96 : vector<1x4x128xf32> to vector<2x4x128xf32>
    %102 = arith.mulf %100, %101 : vector<2x4x128xf32>
    %103 = vector.broadcast %93 : vector<2x1x128xf32> to vector<2x4x128xf32>
    %104 = vector.broadcast %99 : vector<1x4x128xf32> to vector<2x4x128xf32>
    %105 = arith.mulf %103, %104 : vector<2x4x128xf32>
    %106 = arith.subf %102, %105 : vector<2x4x128xf32>
    %107 = arith.addf %79, %106 : vector<2x4x128xf32>
    %108 = vector.broadcast %90 : vector<2x1x128xf32> to vector<2x4x128xf32>
    %109 = vector.broadcast %99 : vector<1x4x128xf32> to vector<2x4x128xf32>
    %110 = arith.mulf %108, %109 : vector<2x4x128xf32>
    %111 = vector.broadcast %93 : vector<2x1x128xf32> to vector<2x4x128xf32>
    %112 = vector.broadcast %96 : vector<1x4x128xf32> to vector<2x4x128xf32>
    %113 = arith.mulf %111, %112 : vector<2x4x128xf32>
    %114 = arith.addf %110, %113 : vector<2x4x128xf32>
    %115 = arith.addf %87, %114 : vector<2x4x128xf32>
    %c0_6 = arith.constant 0 : index
    %c0_7 = arith.constant 0 : index
    %c0_8 = arith.constant 0 : index
    %116 = vector.load %arg3[%c0_6, %c0_7, %c0_8] : memref<2x8x128xf32, #tpu.memory_space<vmem>>, vector<2x4x128xf32>
    tpu.vector_store %arg3[%c0_6, %c0_7, %c0_8], %107 {strides = array<i32>} : memref<2x8x128xf32, #tpu.memory_space<vmem>>, vector<2x4x128xf32>,
    %c0_9 = arith.constant 0 : index
    %c4 = arith.constant 4 : index
    %c0_10 = arith.constant 0 : index
    %117 = vector.load %arg3[%c0_9, %c4, %c0_10] : memref<2x8x128xf32, #tpu.memory_space<vmem>>, vector<2x4x128xf32>
    tpu.vector_store %arg3[%c0_9, %c4, %c0_10], %115 {strides = array<i32>} : memref<2x8x128xf32, #tpu.memory_space<vmem>>, vector<2x4x128xf32>,
    return
  }
  func.func @transform_0(%arg0: i32) -> (i32, i32, i32) {
    %c0_i32 = arith.constant 0 : i32
    %c0_i32_0 = arith.constant 0 : i32
    %c0_i32_1 = arith.constant 0 : i32
    return %c0_i32, %c0_i32_0, %arg0 : i32, i32, i32
  }
  func.func @transform_1(%arg0: i32) -> (i32, i32, i32) {
    %c0_i32 = arith.constant 0 : i32
    %c0_i32_0 = arith.constant 0 : i32
    %c0_i32_1 = arith.constant 0 : i32
    return %c0_i32, %c0_i32_0, %arg0 : i32, i32, i32
  }
  func.func @transform_2(%arg0: i32) -> (i32, i32, i32) {
    %c0_i32 = arith.constant 0 : i32
    %c0_i32_0 = arith.constant 0 : i32
    %c0_i32_1 = arith.constant 0 : i32
    return %c0_i32, %c0_i32_0, %arg0 : i32, i32, i32
  }
}

</mosaic_0001>

<llo_original>
// kernel: tpu_custom_call.1
$region0: #{tpu_custom_call.1}
  #allocation0 [shape = 'u32[]', space=smem, size = 0x4, offset = 0x4, fixed_abs, tag = 'smem constant byte address 0x4 - core index']
  #allocation1 [shape = 'u32[144,128]{1,0:T(1,128)}', space=vmem, size = 0x12000, scoped, tag = 'internal scratch']
  %s0 = inlined_call_operand.hbm [shape: f32[2,8,128], index: 0, kind: input, shape index: {}]
  %s1 = inlined_call_operand.hbm [shape: f32[4,8,128], index: 1, kind: input, shape index: {}]
  %s2 = inlined_call_operand.hbm [shape: f32[2,8,128], index: 2, kind: output, shape index: {}]
  %s3 = sld [smem:[#allocation0]]
  $region26: #{tpu_custom_call.1} parent=0
    _
  %s5 = ssub.s32 1, %s3
  %s6 = scalar_select 0, %s5, %s3
  $region1: #{tpu_custom_call.1} parent=0
    #allocation2 [shape = 'u8[8192]{0}', space=vmem, size = 0x2000, scoped, tag = 'input window, operand 0, single buffered']
    #allocation3 [shape = 's32[1]{0}', space=sflag, size = 0x4, scoped, tag = 'scoped memory for tpu_custom_call.1']
    #allocation4 [shape = 's32[1]{0}', space=sflag, size = 0x4, scoped, tag = 'scoped memory for tpu_custom_call.1']
    #allocation5 [shape = 'u8[16384]{0}', space=vmem, size = 0x4000, scoped, tag = 'input window, operand 1, single buffered']
    #allocation6 [shape = 's32[1]{0}', space=sflag, size = 0x4, scoped, tag = 'scoped memory for tpu_custom_call.1']
    #allocation7 [shape = 'u8[8192]{0}', space=vmem, size = 0x2000, scoped, tag = 'output window, operand 0, single buffered']
    %7 = vsyncpa [#allocation3], 0
    %8 = vsyncpa [#allocation6], 0
    %9 = vsyncpa [#allocation4], 0
    // Predicated region
    $region2: #{tpu_custom_call.1} parent=1 // pred_check
      _
    $region3: #{tpu_custom_call.1} parent=1 // pred_check_branch
      %11 = sbr.rel (0) target = $region5
    $region4: #{tpu_custom_call.1} parent=1 // pred_region
      %s13 = ssub.s32 256, 256
      %14 = vsyncadd [#allocation3], %s13
      %s15 = sshll.u32 [#allocation2], 4
      %s16 = int_to_ptr.vmem [resolvable:$true] %s15
      %21 = dma.hbm_to_vmem [thread:$0]  %s0, 256, %s16, [#allocation3], 128, 128, 8
    $region5: #{tpu_custom_call.1} parent=1 // pred_fallthru
      _
    // Predicated region
    $region6: #{tpu_custom_call.1} parent=1 // pred_check
      _
    $region7: #{tpu_custom_call.1} parent=1 // pred_check_branch
      %23 = sbr.rel (0) target = $region9
    $region8: #{tpu_custom_call.1} parent=1 // pred_region
      %s25 = ssub.s32 512, 512
      %26 = vsyncadd [#allocation6], %s25
      %s27 = sshll.u32 [#allocation5], 4
      %s28 = int_to_ptr.vmem [resolvable:$true] %s27
      %33 = dma.hbm_to_vmem [thread:$0]  %s1, 512, %s28, [#allocation6], 128, 128, 8
    $region9: #{tpu_custom_call.1} parent=1 // pred_fallthru
      _
    // Predicated region
    $region10: #{tpu_custom_call.1} parent=1 // pred_check
      _
    $region11: #{tpu_custom_call.1} parent=1 // pred_check_branch
      %35 = sbr.rel (0) target = $region13
    $region12: #{tpu_custom_call.1} parent=1 // pred_region
      %36 = dma.done [#allocation3], 256
    $region13: #{tpu_custom_call.1} parent=1 // pred_fallthru
      _
    // Predicated region
    $region14: #{tpu_custom_call.1} parent=1 // pred_check
      _
    $region15: #{tpu_custom_call.1} parent=1 // pred_check_branch
      %38 = sbr.rel (0) target = $region17
    $region16: #{tpu_custom_call.1} parent=1 // pred_region
      %39 = dma.done [#allocation6], 512
    $region17: #{tpu_custom_call.1} parent=1 // pred_fallthru
      _
    %v40 = vld [vmem:[#allocation2] sm:$0xff]
    %v41 = vld [vmem:[#allocation2 + $0x8] sm:$0xff]
    %v42 = vld [vmem:[#allocation5] sm:$0xff]
    %v43 = vld [vmem:[#allocation5 + $0x8] sm:$0xff]
    %v44 = vld [vmem:[#allocation5 + $0x10] sm:$0xff]
    %v45 = vld [vmem:[#allocation5 + $0x18] sm:$0xff]
    %v46 = vlaneseq
    %v47 = vshrl.u32 %v46, 7
    %v48 = vsub.s32 0, %v47
    %v49 = vrot.slane %v40, %v48
    %v50 = vlaneseq
    %v51 = vshrl.u32 %v50, 7
    %v52 = vsub.s32 0, %v51
    %v53 = vrot.slane %v41, %v52
    %v54 = vmul.f32 %v49, %v42
    %v55 = vmul.f32 %v53, %v42
    %v56 = vlaneseq
    %v57 = vshrl.u32 %v56, 7
    %v58 = vsub.s32 4, %v57
    %v59 = vrot.slane %v40, %v58
    %v60 = vlaneseq
    %v61 = vshrl.u32 %v60, 7
    %v62 = vsub.s32 4, %v61
    %v63 = vrot.slane %v41, %v62
    %v64 = vmul.f32 %v59, %v42
    %v65 = vmul.f32 %v63, %v42
    %v68 = vrot.slane %v64, 4
    %v69 = vrot.slane %v65, 4
    %v72 = vsub.f32 %v54, %v68
    %v73 = vsub.f32 %v55, %v69
    %v74 = vadd.f32 %v72, 0.0
    %v75 = vadd.f32 %v73, 0.0
    %v76 = vadd.f32 %v54, %v68
    %v77 = vadd.f32 %v55, %v69
    %v78 = vadd.f32 %v76, 0.0
    %v79 = vadd.f32 %v77, 0.0
    %v80 = vlaneseq
    %v81 = vshrl.u32 %v80, 7
    %v82 = vsub.s32 1, %v81
    %v83 = vrot.slane %v40, %v82
    %v84 = vlaneseq
    %v85 = vshrl.u32 %v84, 7
    %v86 = vsub.s32 1, %v85
    %v87 = vrot.slane %v41, %v86
    %v88 = vmul.f32 %v83, %v43
    %v89 = vmul.f32 %v87, %v43
    %v90 = vlaneseq
    %v91 = vshrl.u32 %v90, 7
    %v92 = vsub.s32 5, %v91
    %v93 = vrot.slane %v40, %v92
    %v94 = vlaneseq
    %v95 = vshrl.u32 %v94, 7
    %v96 = vsub.s32 5, %v95
    %v97 = vrot.slane %v41, %v96
    %v98 = vmul.f32 %v93, %v43
    %v99 = vmul.f32 %v97, %v43
    %v102 = vrot.slane %v98, 4
    %v103 = vrot.slane %v99, 4
    %v106 = vsub.f32 %v88, %v102
    %v107 = vsub.f32 %v89, %v103
    %v108 = vadd.f32 %v74, %v106
    %v109 = vadd.f32 %v75, %v107
    %v110 = vadd.f32 %v88, %v102
    %v111 = vadd.f32 %v89, %v103
    %v112 = vadd.f32 %v78, %v110
    %v113 = vadd.f32 %v79, %v111
    %v114 = vlaneseq
    %v115 = vshrl.u32 %v114, 7
    %v116 = vsub.s32 2, %v115
    %v117 = vrot.slane %v40, %v116
    %v118 = vlaneseq
    %v119 = vshrl.u32 %v118, 7
    %v120 = vsub.s32 2, %v119
    %v121 = vrot.slane %v41, %v120
    %v122 = vmul.f32 %v117, %v44
    %v123 = vmul.f32 %v121, %v44
    %v124 = vlaneseq
    %v125 = vshrl.u32 %v124, 7
    %v126 = vsub.s32 6, %v125
    %v127 = vrot.slane %v40, %v126
    %v128 = vlaneseq
    %v129 = vshrl.u32 %v128, 7
    %v130 = vsub.s32 6, %v129
    %v131 = vrot.slane %v41, %v130
    %v132 = vmul.f32 %v127, %v44
    %v133 = vmul.f32 %v131, %v44
    %v136 = vrot.slane %v132, 4
    %v137 = vrot.slane %v133, 4
    %v140 = vsub.f32 %v122, %v136
    %v141 = vsub.f32 %v123, %v137
    %v142 = vadd.f32 %v108, %v140
    %v143 = vadd.f32 %v109, %v141
    %v144 = vadd.f32 %v122, %v136
    %v145 = vadd.f32 %v123, %v137
    %v146 = vadd.f32 %v112, %v144
    %v147 = vadd.f32 %v113, %v145
    %v148 = vlaneseq
    %v149 = vshrl.u32 %v148, 7
    %v150 = vsub.s32 3, %v149
    %v151 = vrot.slane %v40, %v150
    %v152 = vlaneseq
    %v153 = vshrl.u32 %v152, 7
    %v154 = vsub.s32 3, %v153
    %v155 = vrot.slane %v41, %v154
    %v156 = vmul.f32 %v151, %v45
    %v157 = vmul.f32 %v155, %v45
    %v158 = vlaneseq
    %v159 = vshrl.u32 %v158, 7
    %v160 = vsub.s32 7, %v159
    %v161 = vrot.slane %v40, %v160
    %v162 = vlaneseq
    %v163 = vshrl.u32 %v162, 7
    %v164 = vsub.s32 7, %v163
    %v165 = vrot.slane %v41, %v164
    %v166 = vmul.f32 %v161, %v45
    %v167 = vmul.f32 %v165, %v45
    %v170 = vrot.slane %v166, 4
    %v171 = vrot.slane %v167, 4
    %v174 = vsub.f32 %v156, %v170
    %v175 = vsub.f32 %v157, %v171
    %v176 = vadd.f32 %v142, %v174
    %v177 = vadd.f32 %v143, %v175
    %v178 = vadd.f32 %v156, %v170
    %v179 = vadd.f32 %v157, %v171
    %v180 = vadd.f32 %v146, %v178
    %v181 = vadd.f32 %v147, %v179
    %182 = vst [vmem:[#allocation7] sm:$0xf] %v176
    %183 = vst [vmem:[#allocation7 + $0x8] sm:$0xf] %v177
    %184 = vst [vmem:[#allocation7] sm:$0xf0] %v180
    %185 = vst [vmem:[#allocation7 + $0x8] sm:$0xf0] %v181
    // Predicated region
    $region18: #{tpu_custom_call.1} parent=1 // pred_check
      _
    $region19: #{tpu_custom_call.1} parent=1 // pred_check_branch
      %187 = sbr.rel (0) target = $region21
    $region20: #{tpu_custom_call.1} parent=1 // pred_region
      %s189 = ssub.s32 256, 256
      %190 = vsyncadd [#allocation4], %s189
      %s191 = sshll.u32 [#allocation7], 4
      %s192 = int_to_ptr.vmem [resolvable:$true] %s191
      %197 = dma.vmem_to_hbm [thread:$0]  %s192, 256, %s2, [#allocation4], 128, 128, 8
    $region21: #{tpu_custom_call.1} parent=1 // pred_fallthru
      _
    // Predicated region
    $region22: #{tpu_custom_call.1} parent=1 // pred_check
      _
    $region23: #{tpu_custom_call.1} parent=1 // pred_check_branch
      %199 = sbr.rel (0) target = $region25
    $region24: #{tpu_custom_call.1} parent=1 // pred_region
      %200 = dma.done [#allocation4], 256
    $region25: #{tpu_custom_call.1} parent=1 // pred_fallthru
      _
    %201 = vsyncpa [#allocation3], 1
    %202 = vsyncpa [#allocation6], 1
    %203 = vsyncpa [#allocation4], 1

</llo_original>
